<compile_context>
chip_gen: v5e
topology: v5e:2x2
jax: 0.10.0
libtpu: 0.0.40
codegen_flags: <defaults>
</compile_context>

<pallas_src>
import functools

import jax
import jax.numpy as jnp
from jax.experimental import pallas as pl
from jax.experimental.pallas import tpu as pltpu

ACG_LEN = 100                    # module uses a global ACG_LEN; fixed here in-script
_H1, _H2, _HO = 128, 256, 128    # lane-padded widths for 125 / 250 / 100
_H3 = 2 * _HO                    # packed fc3 width: [mean | log-sigma]
_TB_MAX = 2048                   # max batch tile (rows per grid step)
_VMEM_LIMIT = 48 * 1024 * 1024   # covers v5e's 16 MiB scoped default; < v7x 64 MiB phys


def _decoder_kernel(z_ref, w1_ref, b1_ref, w2_ref, b2_ref, w3_ref, b3_ref,
                    mean_ref, sigma_ref):
    x = z_ref[...]
    # fc1 + relu (MXU matmul, f32 accumulate; bias/relu on VPU in f32)
    h1 = jnp.dot(x, w1_ref[...], preferred_element_type=jnp.float32)
    h1 = jnp.maximum(h1 + b1_ref[...], 0.0)
    # fc2 + relu
    h2 = jnp.dot(h1.astype(w2_ref.dtype), w2_ref[...],
                 preferred_element_type=jnp.float32)
    h2 = jnp.maximum(h2 + b2_ref[...], 0.0)
    # dropout(p=0.1): identity in eval/inference mode.
    # TODO(synk): training-mode dropout would use pltpu.prng_seed/prng_random_bits.
    # fc3: single N=256 matmul, mean in lanes [0,128), log-sigma in lanes [128,256).
    h3 = jnp.dot(h2.astype(w3_ref.dtype), w3_ref[...],
                 preferred_element_type=jnp.float32) + b3_ref[...]
    mean_ref[...] = h3[:, :_HO]                       # vreg-aligned split, no XLU
    # exp may overflow to +inf in f32; clip(inf) -> 1e5, matching torch.clamp.
    sigma_ref[...] = jnp.clip(jnp.exp(h3[:, _HO:]), 1e-05, 100000.0)


def _pad2d(x, rows, cols):
    return jnp.pad(x, ((0, rows - x.shape[0]), (0, cols - x.shape[1])))


def pack_params(params, param_dtype=jnp.bfloat16):
    """Zero-pad weights/biases to lane-aligned shapes; pack fc3 as one (256,256) weight."""
    w1, b1, w2, b2, w3, b3 = params
    d = w1.shape[0]
    w1p = _pad2d(w1, d, _H1).astype(param_dtype)
    b1p = _pad2d(b1, 1, _H1).astype(jnp.float32)
    w2p = _pad2d(w2, _H1, _H2).astype(param_dtype)
    b2p = _pad2d(b2, 1, _H2).astype(jnp.float32)
    w3m = _pad2d(w3[:, :ACG_LEN], _H2, _HO)
    w3s = _pad2d(w3[:, ACG_LEN:], _H2, _HO)
    w3p = jnp.concatenate([w3m, w3s], axis=1).astype(param_dtype)      # (256, 256)
    b3m = _pad2d(b3[:, :ACG_LEN], 1, _HO)
    b3s = _pad2d(b3[:, ACG_LEN:], 1, _HO)
    b3p = jnp.concatenate([b3m, b3s], axis=1).astype(jnp.float32)      # (1, 256)
    return w1p, b1p, w2p, b2p, w3p, b3p


def _tile_plan(B):
    """Pick (TB, Bp, n_steps): TB multiple of 8, >=2 (even) grid steps when B >= 16."""
    b8 = max(8, ((B + 7) // 8) * 8)
    n_steps = max(1, -(-b8 // _TB_MAX))
    if b8 >= 16:
        n_steps = max(n_steps, 2)       # keep both v7x TensorCores busy
    if n_steps > 1 and (n_steps % 2):
        n_steps += 1                    # even step count balances the 2 TCs
    tb = -(-b8 // n_steps)
    tb = ((tb + 7) // 8) * 8
    return tb, tb * n_steps, n_steps


def forward_acg_decoder(Z, params, param_dtype=jnp.bfloat16, return_padded=False):
    """Z: (batch, D_latent) float32. Returns (mean, sigma), each (batch, 1, ACG_LEN).

    With return_padded=True, returns lane-padded (Bp, 1, 128) arrays (rows >= batch
    and lanes >= ACG_LEN are padding) and skips the wrapper slice copy.
    """
    B, D = Z.shape
    w1p, b1p, w2p, b2p, w3p, b3p = pack_params(params, param_dtype)

    TB, Bp, n_steps = _tile_plan(B)
    Zp = jnp.pad(Z, ((0, Bp - B), (0, 0))).astype(param_dtype)

    resident = lambda shape: pl.BlockSpec(shape, lambda i: (0, 0))   # stays in VMEM
    tiled = lambda shape: pl.BlockSpec(shape, lambda i: (i, 0))

    p_bytes = jnp.dtype(param_dtype).itemsize
    flops = 2 * Bp * (D * _H1 + _H1 * _H2 + _H2 * _H3)
    weight_bytes = (p_bytes * (D * _H1 + _H1 * _H2 + _H2 * _H3)
                    + 4 * (_H1 + _H2 + _H3))
    io_bytes = p_bytes * Bp * D + 4 * Bp * _H3

    mean_p, sigma_p = pl.pallas_call(
        _decoder_kernel,
        out_shape=(jax.ShapeDtypeStruct((Bp, _HO), jnp.float32),
                   jax.ShapeDtypeStruct((Bp, _HO), jnp.float32)),
        grid=(n_steps,),
        in_specs=[
            tiled((TB, D)),
            resident((D, _H1)), resident((1, _H1)),
            resident((_H1, _H2)), resident((1, _H2)),
            resident((_H2, _H3)), resident((1, _H3)),
        ],
        out_specs=(tiled((TB, _HO)), tiled((TB, _HO))),
        compiler_params=pltpu.CompilerParams(
            dimension_semantics=("parallel",),
            vmem_limit_bytes=_VMEM_LIMIT),
        cost_estimate=pl.CostEstimate(flops=flops,
                                      transcendentals=Bp * _HO,
                                      bytes_accessed=weight_bytes + io_bytes),
    )(Zp, w1p, b1p, w2p, b2p, w3p, b3p)

    if return_padded:
        return mean_p[:, None, :], sigma_p[:, None, :]

    # slice padding back off and match torch's .reshape(-1, 1, ACG_LEN)
    mean = mean_p[:B, :ACG_LEN].reshape(B, 1, ACG_LEN)
    sigma = sigma_p[:B, :ACG_LEN].reshape(B, 1, ACG_LEN)
    return mean, sigma


def init_params(key, d_latent):
    """Deterministic parameter init matching the layer shapes of the module."""
    k1, k2, k3, k4, k5, k6 = jax.random.split(key, 6)
    s1 = 1.0 / jnp.sqrt(d_latent)
    s2 = 1.0 / jnp.sqrt(125.0)
    s3 = 1.0 / jnp.sqrt(250.0)
    w1 = jax.random.uniform(k1, (d_latent, 125), jnp.float32, -s1, s1)
    b1 = jax.random.uniform(k2, (1, 125), jnp.float32, -s1, s1)
    w2 = jax.random.uniform(k3, (125, 250), jnp.float32, -s2, s2)
    b2 = jax.random.uniform(k4, (1, 250), jnp.float32, -s2, s2)
    w3 = jax.random.uniform(k5, (250, ACG_LEN * 2), jnp.float32, -s3, s3)
    b3 = jax.random.uniform(k6, (1, ACG_LEN * 2), jnp.float32, -s3, s3)
    return w1, b1, w2, b2, w3, b3


if __name__ == "__main__":
    D_latent = 32
    batch = 8

    key = jax.random.PRNGKey(0)
    kz, kp = jax.random.split(key)
    Z = jax.random.normal(kz, (batch, D_latent), jnp.float32)
    params = init_params(kp, D_latent)

    # plain-JAX reference (eval mode, dropout = identity)
    w1, b1, w2, b2, w3, b3 = params
    h = jnp.maximum(Z @ w1 + b1, 0.0)
    h = jnp.maximum(h @ w2 + b2, 0.0)
    h = h @ w3 + b3
    ref_mean = h[:, :ACG_LEN].reshape(batch, 1, ACG_LEN)
    ref_sigma = jnp.clip(jnp.exp(h[:, ACG_LEN:]), 1e-5, 1e5).reshape(batch, 1, ACG_LEN)

    # exactness check: f32 weight path
    f32_fwd = jax.jit(functools.partial(forward_acg_decoder, param_dtype=jnp.float32))
    mean32, sigma32 = f32_fwd(Z, params)
    jax.block_until_ready((mean32, sigma32))
    assert mean32.shape == (batch, 1, ACG_LEN) and sigma32.shape == (batch, 1, ACG_LEN)
    assert jnp.allclose(mean32, ref_mean, atol=1e-5, rtol=1e-5)
    assert jnp.allclose(sigma32, ref_sigma, atol=1e-5, rtol=1e-5)

    # default perf path: bf16 MXU operands, f32 accumulate / elementwise
    mean, sigma = jax.jit(forward_acg_decoder)(Z, params)
    jax.block_until_ready((mean, sigma))
    assert mean.shape == (batch, 1, ACG_LEN) and sigma.shape == (batch, 1, ACG_LEN)
    assert jnp.allclose(mean, ref_mean, atol=5e-2, rtol=5e-2)
    assert jnp.allclose(sigma, ref_sigma, atol=5e-2, rtol=5e-2)

    print("KERNEL_OK")
</pallas_src>

<mosaic_0001>
module attributes {stable_mosaic.version = 11 : i64} {
  func.func @_decoder_kernel(%arg0: i32, %arg1: memref<8x32xf32, #tpu.memory_space<vmem>>, %arg2: memref<32x128xf32, #tpu.memory_space<vmem>>, %arg3: memref<1x128xf32, #tpu.memory_space<vmem>>, %arg4: memref<128x256xf32, #tpu.memory_space<vmem>>, %arg5: memref<1x256xf32, #tpu.memory_space<vmem>>, %arg6: memref<256x256xf32, #tpu.memory_space<vmem>>, %arg7: memref<1x256xf32, #tpu.memory_space<vmem>>, %arg8: memref<8x128xf32, #tpu.memory_space<vmem>>, %arg9: memref<8x128xf32, #tpu.memory_space<vmem>>) attributes {dimension_semantics = [#tpu.dimension_semantics<parallel>], iteration_bounds = array<i64: 1>, scalar_prefetch = 0 : i64, scratch_operands = 0 : i64, tpu.core_type = #tpu.core_type<tc>, window_params = [{transform_indices = @transform_0, window_bounds = array<i64: 8, 32>}, {pipeline_mode = #tpu.pipeline_mode<synchronous>, transform_indices = @transform_1, window_bounds = array<i64: 32, 128>}, {pipeline_mode = #tpu.pipeline_mode<synchronous>, transform_indices = @transform_2, window_bounds = array<i64: 1, 128>}, {pipeline_mode = #tpu.pipeline_mode<synchronous>, transform_indices = @transform_3, window_bounds = array<i64: 128, 256>}, {pipeline_mode = #tpu.pipeline_mode<synchronous>, transform_indices = @transform_4, window_bounds = array<i64: 1, 256>}, {pipeline_mode = #tpu.pipeline_mode<synchronous>, transform_indices = @transform_5, window_bounds = array<i64: 256, 256>}, {pipeline_mode = #tpu.pipeline_mode<synchronous>, transform_indices = @transform_6, window_bounds = array<i64: 1, 256>}, {transform_indices = @transform_7, window_bounds = array<i64: 8, 128>}, {transform_indices = @transform_8, window_bounds = array<i64: 8, 128>}]} {
    %c0 = arith.constant 0 : index
    %c0_0 = arith.constant 0 : index
    %0 = vector.load %arg1[%c0, %c0_0] : memref<8x32xf32, #tpu.memory_space<vmem>>, vector<8x32xf32>
    %c0_1 = arith.constant 0 : index
    %c0_2 = arith.constant 0 : index
    %1 = vector.load %arg2[%c0_1, %c0_2] : memref<32x128xf32, #tpu.memory_space<vmem>>, vector<32x128xf32>
    %cst = arith.constant dense<0.000000e+00> : vector<8x128xf32>
    %2 = tpu.matmul %0, %1, %cst {dimension_numbers = #tpu.dot_dimension_numbers<[1], [0], [0], [1], [0, 0, 1, 1], [], []>} : vector<8x32xf32>, vector<32x128xf32>, vector<8x128xf32> -> vector<8x128xf32>
    %c0_3 = arith.constant 0 : index
    %c0_4 = arith.constant 0 : index
    %3 = vector.load %arg3[%c0_3, %c0_4] : memref<1x128xf32, #tpu.memory_space<vmem>>, vector<1x128xf32>
    %4 = vector.broadcast %3 : vector<1x128xf32> to vector<8x128xf32>
    %5 = arith.addf %2, %4 : vector<8x128xf32>
    %cst_5 = arith.constant 0.000000e+00 : f32
    %6 = vector.broadcast %cst_5 : f32 to vector<8x128xf32>
    %7 = arith.maximumf %5, %6 : vector<8x128xf32>
    %c0_6 = arith.constant 0 : index
    %c0_7 = arith.constant 0 : index
    %8 = vector.load %arg4[%c0_6, %c0_7] : memref<128x256xf32, #tpu.memory_space<vmem>>, vector<128x256xf32>
    %cst_8 = arith.constant dense<0.000000e+00> : vector<8x256xf32>
    %9 = tpu.matmul %7, %8, %cst_8 {dimension_numbers = #tpu.dot_dimension_numbers<[1], [0], [0], [1], [0, 0, 1, 1], [], []>} : vector<8x128xf32>, vector<128x256xf32>, vector<8x256xf32> -> vector<8x256xf32>
    %c0_9 = arith.constant 0 : index
    %c0_10 = arith.constant 0 : index
    %10 = vector.load %arg5[%c0_9, %c0_10] : memref<1x256xf32, #tpu.memory_space<vmem>>, vector<1x256xf32>
    %11 = vector.broadcast %10 : vector<1x256xf32> to vector<8x256xf32>
    %12 = arith.addf %9, %11 : vector<8x256xf32>
    %cst_11 = arith.constant 0.000000e+00 : f32
    %13 = vector.broadcast %cst_11 : f32 to vector<8x256xf32>
    %14 = arith.maximumf %12, %13 : vector<8x256xf32>
    %c0_12 = arith.constant 0 : index
    %c0_13 = arith.constant 0 : index
    %15 = vector.load %arg6[%c0_12, %c0_13] : memref<256x256xf32, #tpu.memory_space<vmem>>, vector<256x256xf32>
    %cst_14 = arith.constant dense<0.000000e+00> : vector<8x256xf32>
    %16 = tpu.matmul %14, %15, %cst_14 {dimension_numbers = #tpu.dot_dimension_numbers<[1], [0], [0], [1], [0, 0, 1, 1], [], []>} : vector<8x256xf32>, vector<256x256xf32>, vector<8x256xf32> -> vector<8x256xf32>
    %c0_15 = arith.constant 0 : index
    %c0_16 = arith.constant 0 : index
    %17 = vector.load %arg7[%c0_15, %c0_16] : memref<1x256xf32, #tpu.memory_space<vmem>>, vector<1x256xf32>
    %18 = vector.broadcast %17 : vector<1x256xf32> to vector<8x256xf32>
    %19 = arith.addf %16, %18 : vector<8x256xf32>
    %20 = vector.extract_strided_slice %19 {offsets = [0, 0], sizes = [8, 128], strides = [1, 1]} : vector<8x256xf32> to vector<8x128xf32>
    %c0_17 = arith.constant 0 : index
    %c0_18 = arith.constant 0 : index
    %21 = vector.load %arg8[%c0_17, %c0_18] : memref<8x128xf32, #tpu.memory_space<vmem>>, vector<8x128xf32>
    tpu.vector_store %arg8[%c0_17, %c0_18], %20 {strides = array<i32>} : memref<8x128xf32, #tpu.memory_space<vmem>>, vector<8x128xf32>,
    %22 = vector.extract_strided_slice %19 {offsets = [0, 128], sizes = [8, 128], strides = [1, 1]} : vector<8x256xf32> to vector<8x128xf32>
    %23 = math.exp %22 : vector<8x128xf32>
    %cst_19 = arith.constant 9.99999974E-6 : f32
    %cst_20 = arith.constant 1.000000e+05 : f32
    %24 = vector.broadcast %cst_19 : f32 to vector<8x128xf32>
    %25 = arith.maximumf %24, %23 : vector<8x128xf32>
    %26 = vector.broadcast %cst_20 : f32 to vector<8x128xf32>
    %27 = arith.minimumf %26, %25 : vector<8x128xf32>
    %c0_21 = arith.constant 0 : index
    %c0_22 = arith.constant 0 : index
    %28 = vector.load %arg9[%c0_21, %c0_22] : memref<8x128xf32, #tpu.memory_space<vmem>>, vector<8x128xf32>
    tpu.vector_store %arg9[%c0_21, %c0_22], %27 {strides = array<i32>} : memref<8x128xf32, #tpu.memory_space<vmem>>, vector<8x128xf32>,
    return
  }
  func.func @transform_0(%arg0: i32) -> (i32, i32) {
    %c0_i32 = arith.constant 0 : i32
    %c0_i32_0 = arith.constant 0 : i32
    return %arg0, %c0_i32 : i32, i32
  }
  func.func @transform_1(%arg0: i32) -> (i32, i32) {
    %c0_i32 = arith.constant 0 : i32
    %c0_i32_0 = arith.constant 0 : i32
    %c0_i32_1 = arith.constant 0 : i32
    return %c0_i32, %c0_i32_0 : i32, i32
  }
  func.func @transform_2(%arg0: i32) -> (i32, i32) {
    %c0_i32 = arith.constant 0 : i32
    %c0_i32_0 = arith.constant 0 : i32
    %c0_i32_1 = arith.constant 0 : i32
    return %c0_i32, %c0_i32_0 : i32, i32
  }
  func.func @transform_3(%arg0: i32) -> (i32, i32) {
    %c0_i32 = arith.constant 0 : i32
    %c0_i32_0 = arith.constant 0 : i32
    %c0_i32_1 = arith.constant 0 : i32
    return %c0_i32, %c0_i32_0 : i32, i32
  }
  func.func @transform_4(%arg0: i32) -> (i32, i32) {
    %c0_i32 = arith.constant 0 : i32
    %c0_i32_0 = arith.constant 0 : i32
    %c0_i32_1 = arith.constant 0 : i32
    return %c0_i32, %c0_i32_0 : i32, i32
  }
  func.func @transform_5(%arg0: i32) -> (i32, i32) {
    %c0_i32 = arith.constant 0 : i32
    %c0_i32_0 = arith.constant 0 : i32
    %c0_i32_1 = arith.constant 0 : i32
    return %c0_i32, %c0_i32_0 : i32, i32
  }
  func.func @transform_6(%arg0: i32) -> (i32, i32) {
    %c0_i32 = arith.constant 0 : i32
    %c0_i32_0 = arith.constant 0 : i32
    %c0_i32_1 = arith.constant 0 : i32
    return %c0_i32, %c0_i32_0 : i32, i32
  }
  func.func @transform_7(%arg0: i32) -> (i32, i32) {
    %c0_i32 = arith.constant 0 : i32
    %c0_i32_0 = arith.constant 0 : i32
    return %arg0, %c0_i32 : i32, i32
  }
  func.func @transform_8(%arg0: i32) -> (i32, i32) {
    %c0_i32 = arith.constant 0 : i32
    %c0_i32_0 = arith.constant 0 : i32
    return %arg0, %c0_i32 : i32, i32
  }
}

</mosaic_0001>

<llo_original>
// kernel: forward_acg_decoder.1
$region0: #{forward_acg_decoder.1}
  #allocation0 [shape = 'u32[]', space=smem, size = 0x4, offset = 0x4, fixed_abs, tag = 'smem constant byte address 0x4 - core index']
  #allocation1 [shape = 'u32[72,128]{1,0:T(1,128)}', space=vmem, size = 0x9000, scoped, tag = 'internal scratch']
  %s0 = inlined_call_operand.vmem [shape: f32[8,32], index: 0, kind: input, shape index: {}]
  %s1 = inlined_call_operand.vmem [shape: f32[32,128], index: 1, kind: input, shape index: {}]
  %s2 = inlined_call_operand.vmem [shape: f32[1,128], index: 2, kind: input, shape index: {}]
  %s3 = inlined_call_operand.vmem [shape: f32[128,256], index: 3, kind: input, shape index: {}]
  %s4 = inlined_call_operand.vmem [shape: f32[1,256], index: 4, kind: input, shape index: {}]
  %s5 = inlined_call_operand.vmem [shape: f32[256,256], index: 5, kind: input, shape index: {}]
  %s6 = inlined_call_operand.vmem [shape: f32[1,256], index: 6, kind: input, shape index: {}]
  %s7 = inlined_call_operand.hbm [shape: f32[8,128], index: 7, kind: output, shape index: {0}]
  %s8 = inlined_call_operand.hbm [shape: f32[8,128], index: 8, kind: output, shape index: {1}]
  %9 = xla_tuple %s7, %s8
  %s10 = sld [smem:[#allocation0]]
  $region46: #{forward_acg_decoder.1} parent=0
    _
  %s12 = ssub.s32 1, %s10
  %s13 = scalar_select 0, %s12, %s10
  $region1: #{forward_acg_decoder.1} parent=0
    #allocation2 [shape = 'u8[4096]{0}', space=vmem, size = 0x1000, scoped, tag = 'output window, operand 0, single buffered']
    #allocation3 [shape = 's32[1]{0}', space=sflag, size = 0x4, scoped, tag = 'scoped memory for forward_acg_decoder.1']
    #allocation4 [shape = 'u8[4096]{0}', space=vmem, size = 0x1000, scoped, tag = 'output window, operand 1, single buffered']
    #allocation5 [shape = 's32[1]{0}', space=sflag, size = 0x4, scoped, tag = 'scoped memory for forward_acg_decoder.1']
    %14 = vsyncpa [#allocation3], 0
    %15 = vsyncpa [#allocation5], 0
    // Predicated region
    $region2: #{forward_acg_decoder.1} parent=1 // pred_check
      _
    $region3: #{forward_acg_decoder.1} parent=1 // pred_check_branch
      %17 = sbr.rel (0) target = $region5
    $region4: #{forward_acg_decoder.1} parent=1 // pred_region
      _
    $region5: #{forward_acg_decoder.1} parent=1 // pred_fallthru
      _
    // Predicated region
    $region6: #{forward_acg_decoder.1} parent=1 // pred_check
      _
    $region7: #{forward_acg_decoder.1} parent=1 // pred_check_branch
      %19 = sbr.rel (0) target = $region9
    $region8: #{forward_acg_decoder.1} parent=1 // pred_region
      _
    $region9: #{forward_acg_decoder.1} parent=1 // pred_fallthru
      _
    // Predicated region
    $region10: #{forward_acg_decoder.1} parent=1 // pred_check
      _
    $region11: #{forward_acg_decoder.1} parent=1 // pred_check_branch
      %21 = sbr.rel (0) target = $region13
    $region12: #{forward_acg_decoder.1} parent=1 // pred_region
      _
    $region13: #{forward_acg_decoder.1} parent=1 // pred_fallthru
      _
    // Predicated region
    $region14: #{forward_acg_decoder.1} parent=1 // pred_check
      _
    $region15: #{forward_acg_decoder.1} parent=1 // pred_check_branch
      %23 = sbr.rel (0) target = $region17
    $region16: #{forward_acg_decoder.1} parent=1 // pred_region
      _
    $region17: #{forward_acg_decoder.1} parent=1 // pred_fallthru
      _
    // Predicated region
    $region18: #{forward_acg_decoder.1} parent=1 // pred_check
      _
    $region19: #{forward_acg_decoder.1} parent=1 // pred_check_branch
      %25 = sbr.rel (0) target = $region21
    $region20: #{forward_acg_decoder.1} parent=1 // pred_region
      _
    $region21: #{forward_acg_decoder.1} parent=1 // pred_fallthru
      _
    // Predicated region
    $region22: #{forward_acg_decoder.1} parent=1 // pred_check
      _
    $region23: #{forward_acg_decoder.1} parent=1 // pred_check_branch
      %27 = sbr.rel (0) target = $region25
    $region24: #{forward_acg_decoder.1} parent=1 // pred_region
      _
    $region25: #{forward_acg_decoder.1} parent=1 // pred_fallthru
      _
    // Predicated region
    $region26: #{forward_acg_decoder.1} parent=1 // pred_check
      _
    $region27: #{forward_acg_decoder.1} parent=1 // pred_check_branch
      %29 = sbr.rel (0) target = $region29
    $region28: #{forward_acg_decoder.1} parent=1 // pred_region
      _
    $region29: #{forward_acg_decoder.1} parent=1 // pred_fallthru
      _
    %v30 = vld [vmem:[%s0] sm:$0xff]
    %v31 = vld [vmem:[%s1] sm:$0xff]
    %v32 = vld [vmem:[%s1 + $0x8] sm:$0xff]
    %v33 = vld [vmem:[%s1 + $0x10] sm:$0xff]
    %v34 = vld [vmem:[%s1 + $0x18] sm:$0xff]
    %v35 = vld [vmem:[%s2] sm:$0x1]
    %v37 = vperm.slane %v35, 0
    %vm39 = vcmask 261120
    %v41 = vsel %vm39, %v30, 0
    %43 = vmatpush.msra.mxu0 0.0
    %44 = vmatpush.msra.mxu0 0.0
    %45 = vmatpush.msra.mxu0 0.0
    %46 = vmatpush.msra.mxu0 0.0
    %47 = vmatpush.msra.mxu0 0.0
    %48 = vmatpush.msra.mxu0 0.0
    %49 = vmatpush.msra.mxu0 0.0
    %50 = vmatpush.msra.mxu0 0.0
    %51 = vmatpush.msra.mxu0 0.0
    %52 = vmatpush.msra.mxu0 0.0
    %53 = vmatpush.msra.mxu0 0.0
    %54 = vmatpush.msra.mxu0 0.0
    %55 = vmatpush.msra.mxu0 %v34
    %56 = vmatpush.msra.mxu0 %v33
    %57 = vmatpush.msra.mxu0 %v32
    %58 = vmatpush.msra.mxu0 %v31
    %59 = vmatmul.f32.gmra.mxu0 %v41
    %v60 = vpop.f32.mrf.mxu0
    %v61 = vadd.f32 %v37, %v60
    %62 = vdwg.mxu0
    %v63 = vmax.f32 %v61, 0.0
    %v64 = vld [vmem:[%s3] sm:$0xff]
    %v65 = vld [vmem:[%s3 + $0x8] sm:$0xff]
    %v66 = vld [vmem:[%s3 + $0x10] sm:$0xff]
    %v67 = vld [vmem:[%s3 + $0x18] sm:$0xff]
    %v68 = vld [vmem:[%s3 + $0x20] sm:$0xff]
    %v69 = vld [vmem:[%s3 + $0x28] sm:$0xff]
    %v70 = vld [vmem:[%s3 + $0x30] sm:$0xff]
    %v71 = vld [vmem:[%s3 + $0x38] sm:$0xff]
    %v72 = vld [vmem:[%s3 + $0x40] sm:$0xff]
    %v73 = vld [vmem:[%s3 + $0x48] sm:$0xff]
    %v74 = vld [vmem:[%s3 + $0x50] sm:$0xff]
    %v75 = vld [vmem:[%s3 + $0x58] sm:$0xff]
    %v76 = vld [vmem:[%s3 + $0x60] sm:$0xff]
    %v77 = vld [vmem:[%s3 + $0x68] sm:$0xff]
    %v78 = vld [vmem:[%s3 + $0x70] sm:$0xff]
    %v79 = vld [vmem:[%s3 + $0x78] sm:$0xff]
    %v80 = vld [vmem:[%s3 + $0x80] sm:$0xff]
    %v81 = vld [vmem:[%s3 + $0x88] sm:$0xff]
    %v82 = vld [vmem:[%s3 + $0x90] sm:$0xff]
    %v83 = vld [vmem:[%s3 + $0x98] sm:$0xff]
    %v84 = vld [vmem:[%s3 + $0xa0] sm:$0xff]
    %v85 = vld [vmem:[%s3 + $0xa8] sm:$0xff]
    %v86 = vld [vmem:[%s3 + $0xb0] sm:$0xff]
    %v87 = vld [vmem:[%s3 + $0xb8] sm:$0xff]
    %v88 = vld [vmem:[%s3 + $0xc0] sm:$0xff]
    %v89 = vld [vmem:[%s3 + $0xc8] sm:$0xff]
    %v90 = vld [vmem:[%s3 + $0xd0] sm:$0xff]
    %v91 = vld [vmem:[%s3 + $0xd8] sm:$0xff]
    %v92 = vld [vmem:[%s3 + $0xe0] sm:$0xff]
    %v93 = vld [vmem:[%s3 + $0xe8] sm:$0xff]
    %v94 = vld [vmem:[%s3 + $0xf0] sm:$0xff]
    %v95 = vld [vmem:[%s3 + $0xf8] sm:$0xff]
    %v96 = vld [vmem:[%s4] sm:$0x3]
    %v98 = vperm.slane %v96, 0
    %v99 = vperm.slane %v96, 1
    %102 = vmatpush.msra.mxu0 %v94
    %103 = vmatpush.msra.mxu0 %v92
    %104 = vmatpush.msra.mxu0 %v90
    %105 = vmatpush.msra.mxu0 %v88
    %106 = vmatpush.msra.mxu0 %v86
    %107 = vmatpush.msra.mxu0 %v84
    %108 = vmatpush.msra.mxu0 %v82
    %109 = vmatpush.msra.mxu0 %v80
    %110 = vmatpush.msra.mxu0 %v78
    %111 = vmatpush.msra.mxu0 %v76
    %112 = vmatpush.msra.mxu0 %v74
    %113 = vmatpush.msra.mxu0 %v72
    %114 = vmatpush.msra.mxu0 %v70
    %115 = vmatpush.msra.mxu0 %v68
    %116 = vmatpush.msra.mxu0 %v66
    %117 = vmatpush.msra.mxu0 %v64
    %118 = vmatmul.f32.gmra.mxu0 %v63
    %v119 = vpop.f32.mrf.mxu0
    %v120 = vadd.f32 %v98, %v119
    %121 = vdwg.mxu0
    %122 = vmatpush.msra.mxu0 %v95
    %123 = vmatpush.msra.mxu0 %v93
    %124 = vmatpush.msra.mxu0 %v91
    %125 = vmatpush.msra.mxu0 %v89
    %126 = vmatpush.msra.mxu0 %v87
    %127 = vmatpush.msra.mxu0 %v85
    %128 = vmatpush.msra.mxu0 %v83
    %129 = vmatpush.msra.mxu0 %v81
    %130 = vmatpush.msra.mxu0 %v79
    %131 = vmatpush.msra.mxu0 %v77
    %132 = vmatpush.msra.mxu0 %v75
    %133 = vmatpush.msra.mxu0 %v73
    %134 = vmatpush.msra.mxu0 %v71
    %135 = vmatpush.msra.mxu0 %v69
    %136 = vmatpush.msra.mxu0 %v67
    %137 = vmatpush.msra.mxu0 %v65
    %138 = vmatmul.f32.gmra.mxu0 %v63
    %v139 = vpop.f32.mrf.mxu0
    %v140 = vadd.f32 %v99, %v139
    %141 = vdwg.mxu0
    %v142 = vmax.f32 %v120, 0.0
    %v143 = vmax.f32 %v140, 0.0
    %v144 = vld [vmem:[%s5] sm:$0xff]
    %v145 = vld [vmem:[%s5 + $0x8] sm:$0xff]
    %v146 = vld [vmem:[%s5 + $0x10] sm:$0xff]
    %v147 = vld [vmem:[%s5 + $0x18] sm:$0xff]
    %v148 = vld [vmem:[%s5 + $0x20] sm:$0xff]
    %v149 = vld [vmem:[%s5 + $0x28] sm:$0xff]
    %v150 = vld [vmem:[%s5 + $0x30] sm:$0xff]
    %v151 = vld [vmem:[%s5 + $0x38] sm:$0xff]
    %v152 = vld [vmem:[%s5 + $0x40] sm:$0xff]
    %v153 = vld [vmem:[%s5 + $0x48] sm:$0xff]
    %v154 = vld [vmem:[%s5 + $0x50] sm:$0xff]
    %v155 = vld [vmem:[%s5 + $0x58] sm:$0xff]
    %v156 = vld [vmem:[%s5 + $0x60] sm:$0xff]
    %v157 = vld [vmem:[%s5 + $0x68] sm:$0xff]
    %v158 = vld [vmem:[%s5 + $0x70] sm:$0xff]
    %v159 = vld [vmem:[%s5 + $0x78] sm:$0xff]
    %v160 = vld [vmem:[%s5 + $0x80] sm:$0xff]
    %v161 = vld [vmem:[%s5 + $0x88] sm:$0xff]
    %v162 = vld [vmem:[%s5 + $0x90] sm:$0xff]
    %v163 = vld [vmem:[%s5 + $0x98] sm:$0xff]
    %v164 = vld [vmem:[%s5 + $0xa0] sm:$0xff]
    %v165 = vld [vmem:[%s5 + $0xa8] sm:$0xff]
    %v166 = vld [vmem:[%s5 + $0xb0] sm:$0xff]
    %v167 = vld [vmem:[%s5 + $0xb8] sm:$0xff]
    %v168 = vld [vmem:[%s5 + $0xc0] sm:$0xff]
    %v169 = vld [vmem:[%s5 + $0xc8] sm:$0xff]
    %v170 = vld [vmem:[%s5 + $0xd0] sm:$0xff]
    %v171 = vld [vmem:[%s5 + $0xd8] sm:$0xff]
    %v172 = vld [vmem:[%s5 + $0xe0] sm:$0xff]
    %v173 = vld [vmem:[%s5 + $0xe8] sm:$0xff]
    %v174 = vld [vmem:[%s5 + $0xf0] sm:$0xff]
    %v175 = vld [vmem:[%s5 + $0xf8] sm:$0xff]
    %v176 = vld [vmem:[%s5 + $0x100] sm:$0xff]
    %v177 = vld [vmem:[%s5 + $0x108] sm:$0xff]
    %v178 = vld [vmem:[%s5 + $0x110] sm:$0xff]
    %v179 = vld [vmem:[%s5 + $0x118] sm:$0xff]
    %v180 = vld [vmem:[%s5 + $0x120] sm:$0xff]
    %v181 = vld [vmem:[%s5 + $0x128] sm:$0xff]
    %v182 = vld [vmem:[%s5 + $0x130] sm:$0xff]
    %v183 = vld [vmem:[%s5 + $0x138] sm:$0xff]
    %v184 = vld [vmem:[%s5 + $0x140] sm:$0xff]
    %v185 = vld [vmem:[%s5 + $0x148] sm:$0xff]
    %v186 = vld [vmem:[%s5 + $0x150] sm:$0xff]
    %v187 = vld [vmem:[%s5 + $0x158] sm:$0xff]
    %v188 = vld [vmem:[%s5 + $0x160] sm:$0xff]
    %v189 = vld [vmem:[%s5 + $0x168] sm:$0xff]
    %v190 = vld [vmem:[%s5 + $0x170] sm:$0xff]
    %v191 = vld [vmem:[%s5 + $0x178] sm:$0xff]
    %v192 = vld [vmem:[%s5 + $0x180] sm:$0xff]
    %v193 = vld [vmem:[%s5 + $0x188] sm:$0xff]
    %v194 = vld [vmem:[%s5 + $0x190] sm:$0xff]
    %v195 = vld [vmem:[%s5 + $0x198] sm:$0xff]
    %v196 = vld [vmem:[%s5 + $0x1a0] sm:$0xff]
    %v197 = vld [vmem:[%s5 + $0x1a8] sm:$0xff]
    %v198 = vld [vmem:[%s5 + $0x1b0] sm:$0xff]
    %v199 = vld [vmem:[%s5 + $0x1b8] sm:$0xff]
    %v200 = vld [vmem:[%s5 + $0x1c0] sm:$0xff]
    %v201 = vld [vmem:[%s5 + $0x1c8] sm:$0xff]
    %v202 = vld [vmem:[%s5 + $0x1d0] sm:$0xff]
    %v203 = vld [vmem:[%s5 + $0x1d8] sm:$0xff]
    %v204 = vld [vmem:[%s5 + $0x1e0] sm:$0xff]
    %v205 = vld [vmem:[%s5 + $0x1e8] sm:$0xff]
    %v206 = vld [vmem:[%s5 + $0x1f0] sm:$0xff]
    %v207 = vld [vmem:[%s5 + $0x1f8] sm:$0xff]
    %v208 = vld [vmem:[%s6] sm:$0x3]
    %v210 = vperm.slane %v208, 0
    %v211 = vperm.slane %v208, 1
    %214 = vmatpush.msra.mxu0 %v174
    %215 = vmatpush.msra.mxu0 %v172
    %216 = vmatpush.msra.mxu0 %v170
    %217 = vmatpush.msra.mxu0 %v168
    %218 = vmatpush.msra.mxu0 %v166
    %219 = vmatpush.msra.mxu0 %v164
    %220 = vmatpush.msra.mxu0 %v162
    %221 = vmatpush.msra.mxu0 %v160
    %222 = vmatpush.msra.mxu0 %v158
    %223 = vmatpush.msra.mxu0 %v156
    %224 = vmatpush.msra.mxu0 %v154
    %225 = vmatpush.msra.mxu0 %v152
    %226 = vmatpush.msra.mxu0 %v150
    %227 = vmatpush.msra.mxu0 %v148
    %228 = vmatpush.msra.mxu0 %v146
    %229 = vmatpush.msra.mxu0 %v144
    %230 = vmatmul.f32.gmra.mxu0 %v142
    %v231 = vpop.f32.mrf.mxu0
    %v232 = vadd.f32 %v210, %v231
    %233 = vdwg.mxu0
    %234 = vmatpush.msra.mxu0 %v206
    %235 = vmatpush.msra.mxu0 %v204
    %236 = vmatpush.msra.mxu0 %v202
    %237 = vmatpush.msra.mxu0 %v200
    %238 = vmatpush.msra.mxu0 %v198
    %239 = vmatpush.msra.mxu0 %v196
    %240 = vmatpush.msra.mxu0 %v194
    %241 = vmatpush.msra.mxu0 %v192
    %242 = vmatpush.msra.mxu0 %v190
    %243 = vmatpush.msra.mxu0 %v188
    %244 = vmatpush.msra.mxu0 %v186
    %245 = vmatpush.msra.mxu0 %v184
    %246 = vmatpush.msra.mxu0 %v182
    %247 = vmatpush.msra.mxu0 %v180
    %248 = vmatpush.msra.mxu0 %v178
    %249 = vmatpush.msra.mxu0 %v176
    %250 = vmatmul.f32.gmra.mxu0 %v143
    %v251 = vpop.f32.mrf.mxu0
    %v252 = vadd.f32 %v232, %v251
    %253 = vdwg.mxu0
    %254 = vmatpush.msra.mxu0 %v175
    %255 = vmatpush.msra.mxu0 %v173
    %256 = vmatpush.msra.mxu0 %v171
    %257 = vmatpush.msra.mxu0 %v169
    %258 = vmatpush.msra.mxu0 %v167
    %259 = vmatpush.msra.mxu0 %v165
    %260 = vmatpush.msra.mxu0 %v163
    %261 = vmatpush.msra.mxu0 %v161
    %262 = vmatpush.msra.mxu0 %v159
    %263 = vmatpush.msra.mxu0 %v157
    %264 = vmatpush.msra.mxu0 %v155
    %265 = vmatpush.msra.mxu0 %v153
    %266 = vmatpush.msra.mxu0 %v151
    %267 = vmatpush.msra.mxu0 %v149
    %268 = vmatpush.msra.mxu0 %v147
    %269 = vmatpush.msra.mxu0 %v145
    %270 = vmatmul.f32.gmra.mxu0 %v142
    %v271 = vpop.f32.mrf.mxu0
    %v272 = vadd.f32 %v211, %v271
    %273 = vdwg.mxu0
    %274 = vmatpush.msra.mxu0 %v207
    %275 = vmatpush.msra.mxu0 %v205
    %276 = vmatpush.msra.mxu0 %v203
    %277 = vmatpush.msra.mxu0 %v201
    %278 = vmatpush.msra.mxu0 %v199
    %279 = vmatpush.msra.mxu0 %v197
    %280 = vmatpush.msra.mxu0 %v195
    %281 = vmatpush.msra.mxu0 %v193
    %282 = vmatpush.msra.mxu0 %v191
    %283 = vmatpush.msra.mxu0 %v189
    %284 = vmatpush.msra.mxu0 %v187
    %285 = vmatpush.msra.mxu0 %v185
    %286 = vmatpush.msra.mxu0 %v183
    %287 = vmatpush.msra.mxu0 %v181
    %288 = vmatpush.msra.mxu0 %v179
    %289 = vmatpush.msra.mxu0 %v177
    %290 = vmatmul.f32.gmra.mxu0 %v143
    %v291 = vpop.f32.mrf.mxu0
    %v292 = vadd.f32 %v272, %v291
    %293 = vdwg.mxu0
    %294 = vst [vmem:[#allocation2] sm:$0xff] %v252
    %v295 = vmul.f32 %v292, 1.442695
    %v296 = vpow.pop %v295
    %v297 = vmax.f32 %v296, 1e-05
    %v298 = vmin.f32 %v297, 100000.0
    %299 = vst [vmem:[#allocation4] sm:$0xff] %v298
    // Predicated region
    $region30: #{forward_acg_decoder.1} parent=1 // pred_check
      _
    $region31: #{forward_acg_decoder.1} parent=1 // pred_check_branch
      %301 = sbr.rel (0) target = $region33
    $region32: #{forward_acg_decoder.1} parent=1 // pred_region
      %303 = vsyncadd [#allocation3], 0
      %s305 = sshll.u32 [#allocation2], 4
      %s306 = int_to_ptr.vmem [resolvable:$true] %s305
      %s307 = sshll.u32 %s7, 4
      %s308 = int_to_ptr.hbm [resolvable:$true] %s307
      %310 = dma.vmem_to_hbm [thread:$0]  %s306, 128, %s308, [#allocation3]
    $region33: #{forward_acg_decoder.1} parent=1 // pred_fallthru
      _
    // Predicated region
    $region34: #{forward_acg_decoder.1} parent=1 // pred_check
      _
    $region35: #{forward_acg_decoder.1} parent=1 // pred_check_branch
      %312 = sbr.rel (0) target = $region37
    $region36: #{forward_acg_decoder.1} parent=1 // pred_region
      %314 = vsyncadd [#allocation5], 0
      %s316 = sshll.u32 [#allocation4], 4
      %s317 = int_to_ptr.vmem [resolvable:$true] %s316
      %s318 = sshll.u32 %s8, 4
      %s319 = int_to_ptr.hbm [resolvable:$true] %s318
      %321 = dma.vmem_to_hbm [thread:$0]  %s317, 128, %s319, [#allocation5]
    $region37: #{forward_acg_decoder.1} parent=1 // pred_fallthru
      _
    // Predicated region
    $region38: #{forward_acg_decoder.1} parent=1 // pred_check
      _
    $region39: #{forward_acg_decoder.1} parent=1 // pred_check_branch
      %323 = sbr.rel (0) target = $region41
    $region40: #{forward_acg_decoder.1} parent=1 // pred_region
      %325 = dma.done [#allocation3], 128
    $region41: #{forward_acg_decoder.1} parent=1 // pred_fallthru
      _
    // Predicated region
    $region42: #{forward_acg_decoder.1} parent=1 // pred_check
      _
    $region43: #{forward_acg_decoder.1} parent=1 // pred_check_branch
      %327 = sbr.rel (0) target = $region45
    $region44: #{forward_acg_decoder.1} parent=1 // pred_region
      %329 = dma.done [#allocation5], 128
    $region45: #{forward_acg_decoder.1} parent=1 // pred_fallthru
      _
    %330 = vsyncpa [#allocation3], 1
    %331 = vsyncpa [#allocation5], 1

</llo_original>
